<compile_context>
chip_gen: v5e
topology: v5e:2x2
jax: 0.10.0
libtpu: 0.0.40
codegen_flags: <defaults>
</compile_context>

<pallas_src>
import functools

import jax
import jax.numpy as jnp
from jax import lax
from jax.experimental import pallas as pl
from jax.experimental.pallas import tpu as pltpu


def _round_up(a, b):
    return (a + b - 1) // b * b


def _ce_kernel(x_ref, idx_ref, w_ref, lsum_ref, wsum_ref, lacc, wacc,
               *, hw, tile_l, n_chunks, tiles_per_chunk, weighted):
    j = pl.program_id(1)

    @pl.when(j == 0)
    def _():
        lacc[...] = jnp.zeros_like(lacc)
        wacc[...] = jnp.zeros_like(wacc)

    # Ragged-tail / dead-tile mask.  The index_map clamps the spatial block
    # index so the DMA never starts out of bounds, but lanes at/after `hw`
    # (and entire duplicated dead tiles) contain unspecified bytes: mask x and
    # idx BEFORE any arithmetic so garbage can never poison the accumulators.
    if n_chunks > 1:
        tile0 = (pl.program_id(0) % n_chunks) * tiles_per_chunk
    else:
        tile0 = 0
    start = (tile0 + j) * tile_l
    lane = lax.broadcasted_iota(jnp.int32, (1, tile_l), 1)
    valid = (start + lane) < hw                                   # (1, TL) bool

    x = jnp.where(valid, x_ref[0].astype(jnp.float32), 0.0)       # (C, TL)
    idx = jnp.where(valid, idx_ref[0].astype(jnp.int32), -1)      # (1, TL)

    C = x.shape[0]
    cls = lax.broadcasted_iota(jnp.int32, (C, tile_l), 0)
    mask = cls == idx                                             # (C, TL) bool

    # Stable log-sum-exp over the class (sublane) axis.
    m = jnp.max(x, axis=0, keepdims=True)                         # (1, TL)
    lse = m + jnp.log(jnp.sum(jnp.exp(x - m), axis=0, keepdims=True))
    sel = jnp.sum(jnp.where(mask, x, 0.0), axis=0, keepdims=True)  # x[t]

    if weighted:
        w = w_ref[...].astype(jnp.float32)                        # (C, 1)
        w_row = jnp.sum(jnp.where(mask, w, 0.0), axis=0, keepdims=True)
    else:
        # w[t] == 1 on valid lanes, 0 on padded/dead lanes.
        w_row = valid.astype(jnp.float32)

    # Reduce this tile to scalars right away: keeps scratch tiny (no (1, TL)
    # accumulators -> no 8x sublane padding in VMEM) for ~TL/128 extra adds.
    lacc[...] += jnp.sum(w_row * (lse - sel), axis=1, keepdims=True)
    wacc[...] += jnp.sum(w_row, axis=1, keepdims=True)

    @pl.when(j == pl.num_programs(1) - 1)
    def _():
        lsum_ref[0] = lacc[...]
        wsum_ref[0] = wacc[...]


@functools.partial(jax.jit,
                   static_argnames=("tile_l", "n_tiles", "n_chunks", "weighted"))
def _ce_impl(x, t, w, *, tile_l, n_tiles, n_chunks, weighted):
    N, C, HW = x.shape
    # torch.argmax(target, dim=1): one-hot targets -> unique max, first wins.
    # Emit the index stream narrow (int8/int16) to cut its HBM traffic.
    if C <= 127:
        idx_dtype = jnp.int8
    elif C <= 32767:
        idx_dtype = jnp.int16
    else:
        idx_dtype = jnp.int32
    idx = jnp.argmax(t, axis=1).astype(idx_dtype)[:, None, :]      # (N, 1, HW)

    tiles_per_chunk = pl.cdiv(n_tiles, n_chunks)
    P = N * n_chunks

    def batch_of(p):
        return p // n_chunks if n_chunks > 1 else p

    def tile_of(p, j):
        if n_chunks == 1:
            return j
        # Clamp so a (possible) duplicated dead tile still points inside the
        # array; its lanes are fully masked inside the kernel.
        return jnp.minimum((p % n_chunks) * tiles_per_chunk + j, n_tiles - 1)

    kernel = functools.partial(
        _ce_kernel, hw=HW, tile_l=tile_l, n_chunks=n_chunks,
        tiles_per_chunk=tiles_per_chunk, weighted=weighted)

    lsum, wsum = pl.pallas_call(
        kernel,
        out_shape=(jax.ShapeDtypeStruct((P, 1, 1), jnp.float32),
                   jax.ShapeDtypeStruct((P, 1, 1), jnp.float32)),
        grid_spec=pltpu.PrefetchScalarGridSpec(
            num_scalar_prefetch=0,
            grid=(P, tiles_per_chunk),
            in_specs=[
                pl.BlockSpec((1, C, tile_l),
                             lambda p, j: (batch_of(p), 0, tile_of(p, j))),
                pl.BlockSpec((1, 1, tile_l),
                             lambda p, j: (batch_of(p), 0, tile_of(p, j))),
                pl.BlockSpec((C, 1), lambda p, j: (0, 0)),
            ],
            out_specs=[
                pl.BlockSpec((1, 1, 1), lambda p, j: (p, 0, 0)),
                pl.BlockSpec((1, 1, 1), lambda p, j: (p, 0, 0)),
            ],
            scratch_shapes=[
                pltpu.VMEM((1, 1), jnp.float32),   # running weighted loss
                pltpu.VMEM((1, 1), jnp.float32),   # running weight sum
            ],
        ),
        compiler_params=pltpu.CompilerParams(
            dimension_semantics=("parallel", "arbitrary"),
            vmem_limit_bytes=32 * 1024 * 1024,
        ),
    )(x, idx, w)
    return jnp.sum(lsum) / jnp.sum(wsum)


def cross_entropy(logits, target_onehot, is_weight=False, weight=(),
                  _max_lanes=None):
    """Pallas equivalent of CrossEntropy.forward(input, target).

    `_max_lanes` is a test hook that caps the lane tile so the multi-tile /
    dual-core code paths can be exercised at small shapes.
    """
    if logits.ndim == 4:
        N, C, H, W = logits.shape
        x = logits.reshape(N, C, H * W)                 # free: NCHW contiguous
        t = target_onehot.reshape(N, C, H * W)
    elif logits.ndim == 2:
        # TODO(synk): a classes-on-lanes kernel variant would avoid this
        # transpose (an extra HBM pass) and handle vocabulary-sized C.
        M, C = logits.shape
        x = jnp.transpose(logits, (1, 0))[None]         # (1, C, M)
        t = jnp.transpose(target_onehot, (1, 0))[None]
    else:
        raise ValueError("expected (N, C) or (N, C, H, W) logits")

    N, C, HW = x.shape
    if is_weight:
        w = jnp.asarray(weight, jnp.float32).reshape(C, 1)
    else:
        w = jnp.ones((C, 1), jnp.float32)

    # ---- tile-size heuristic -----------------------------------------------
    # HBM target: ~2 MiB of logits per grid step on v5e/v6e, ~4 MiB on v7x
    # (amortizes the ~0.35us/step overhead at 3.2 TB/s).  VMEM cap: the x block
    # pads the class axis to 8 sublanes and the idx block to 32 bytes/lane, so
    # budget double-buffered bytes/lane explicitly and stay under ~24 MiB.
    x_isz = jnp.dtype(logits.dtype).itemsize
    vmem_per_lane = 2 * _round_up(C, 8) * 4 + 2 * 32
    cap_lanes = max(128, (24 << 20) // vmem_per_lane)
    try:
        kind = jax.devices()[0].device_kind.lower()
    except Exception:  # pragma: no cover
        kind = ""
    target_bytes = (4 << 20) if "7" in kind else (2 << 20)
    target_lanes = max(128, target_bytes // (C * x_isz))
    lanes = min(cap_lanes, target_lanes)
    if _max_lanes is not None:
        lanes = min(lanes, max(128, int(_max_lanes)))

    # Equal 128-aligned chunks over HW (no jnp.pad copy, <128 wasted lanes/row).
    n_tiles = pl.cdiv(HW, lanes)
    tile_l = _round_up(pl.cdiv(HW, n_tiles), 128)
    n_tiles = pl.cdiv(HW, tile_l)

    # v7x has two TensorCores: give both work when the batch axis is too short
    # to shard (a harmless extra grid row on single-TC chips).
    n_chunks = 2 if (N == 1 and n_tiles >= 2) else 1

    # TODO(synk): vocabulary-sized C needs a class-axis grid with an online
    # logsumexp accumulator; the (1, C, tile) block does not fit VMEM there.

    return _ce_impl(x, t, w, tile_l=int(tile_l), n_tiles=int(n_tiles),
                    n_chunks=int(n_chunks), weighted=bool(is_weight))


def _reference(logits, target_onehot, is_weight=False, weight=()):
    # pure-JAX reference of F.cross_entropy semantics for verification
    if logits.ndim == 4:
        N, C, H, W = logits.shape
        x = jnp.transpose(logits, (0, 2, 3, 1)).reshape(-1, C)
        t = jnp.transpose(target_onehot, (0, 2, 3, 1)).reshape(-1, C)
    else:
        x, t = logits, target_onehot
        C = logits.shape[1]
    tgt = jnp.argmax(t, axis=1)
    logp = jax.nn.log_softmax(x.astype(jnp.float32), axis=-1)
    nll = -jnp.take_along_axis(logp, tgt[:, None], axis=1)[:, 0]
    if is_weight:
        wv = jnp.asarray(weight, jnp.float32)[tgt]
    else:
        wv = jnp.ones_like(nll)
    return jnp.sum(wv * nll) / jnp.sum(wv)


if __name__ == "__main__":
    key = jax.random.PRNGKey(0)
    N, C, H, W = 2, 4, 16, 16

    k1, k2, k3, k4, k5, k6 = jax.random.split(key, 6)
    logits = jax.random.normal(k1, (N, C, H, W), dtype=jnp.float32)
    classes = jax.random.randint(k2, (N, H, W), 0, C)
    # one-hot target laid out NCHW, matching the PyTorch module's dim=1 argmax
    target = jnp.transpose(jax.nn.one_hot(classes, C, dtype=jnp.float32),
                           (0, 3, 1, 2))

    # unweighted path (module default: is_weight=False)
    loss = jax.block_until_ready(cross_entropy(logits, target))
    ref = _reference(logits, target)
    assert jnp.allclose(loss, ref, atol=1e-5, rtol=1e-5)

    # weighted path (is_weight=True, deterministic synthetic per-class weights)
    wts = [0.5, 1.0, 1.5, 2.0]
    loss_w = jax.block_until_ready(cross_entropy(logits, target, True, wts))
    ref_w = _reference(logits, target, True, wts)
    assert jnp.allclose(loss_w, ref_w, atol=1e-5, rtol=1e-5)

    # multi-tile accumulation path (forces >1 spatial tile via the test hook)
    loss_mt = jax.block_until_ready(cross_entropy(logits, target,
                                                  _max_lanes=128))
    assert jnp.allclose(loss_mt, ref, atol=1e-5, rtol=1e-5)

    # 2-D (M, C) path: ragged last tile (M=72 not a multiple of 128)
    M2, C2 = 72, 8
    logits2 = jax.random.normal(k3, (M2, C2), dtype=jnp.float32)
    classes2 = jax.random.randint(k4, (M2,), 0, C2)
    target2 = jax.nn.one_hot(classes2, C2, dtype=jnp.float32)
    loss2 = jax.block_until_ready(cross_entropy(logits2, target2))
    ref2 = _reference(logits2, target2)
    assert jnp.allclose(loss2, ref2, atol=1e-5, rtol=1e-5)

    # N==1 dual-TensorCore chunk split with an odd tile count (dead-tile clamp,
    # ragged tail, both exercised at small size via the test hook)
    M3, C3 = 300, 4
    logits3 = jax.random.normal(k5, (M3, C3), dtype=jnp.float32)
    classes3 = jax.random.randint(k6, (M3,), 0, C3)
    target3 = jax.nn.one_hot(classes3, C3, dtype=jnp.float32)
    loss3 = jax.block_until_ready(cross_entropy(logits3, target3,
                                                _max_lanes=128))
    ref3 = _reference(logits3, target3)
    assert jnp.allclose(loss3, ref3, atol=1e-5, rtol=1e-5)

    print("KERNEL_OK")
</pallas_src>

<mosaic_0001>
module attributes {stable_mosaic.version = 11 : i64} {
  func.func @_ce_kernel(%arg0: i32, %arg1: i32, %arg2: memref<1x4x256xf32, #tpu.memory_space<vmem>>, %arg3: memref<1x1x256xi8, #tpu.memory_space<vmem>>, %arg4: memref<4x1xf32, #tpu.memory_space<vmem>>, %arg5: memref<1x1x1xf32, #tpu.memory_space<vmem>>, %arg6: memref<1x1x1xf32, #tpu.memory_space<vmem>>, %arg7: memref<1x1xf32, #tpu.memory_space<vmem>>, %arg8: memref<1x1xf32, #tpu.memory_space<vmem>>) attributes {dimension_semantics = [#tpu.dimension_semantics<parallel>, #tpu.dimension_semantics<arbitrary>], iteration_bounds = array<i64: 2, 1>, scalar_prefetch = 0 : i64, scratch_operands = 2 : i64, tpu.core_type = #tpu.core_type<tc>, window_params = [{transform_indices = @transform_0, window_bounds = array<i64: 1, 4, 256>}, {transform_indices = @transform_1, window_bounds = array<i64: 1, 1, 256>}, {pipeline_mode = #tpu.pipeline_mode<synchronous>, transform_indices = @transform_2, window_bounds = array<i64: 4, 1>}, {transform_indices = @transform_3, window_bounds = array<i64: 1, 1, 1>}, {transform_indices = @transform_4, window_bounds = array<i64: 1, 1, 1>}]} {
    %c0_i32 = arith.constant 0 : i32
    %0 = arith.cmpi eq, %arg1, %c0_i32 : i32
    %1 = arith.extui %0 : i1 to i32
    %c0_i32_0 = arith.constant 0 : i32
    %2 = arith.cmpi ne, %1, %c0_i32_0 : i32
    scf.if %2 {
      %cst_24 = arith.constant 0.000000e+00 : f32
      %54 = vector.broadcast %cst_24 : f32 to vector<1x1xf32>
      %c0_25 = arith.constant 0 : index
      %c0_26 = arith.constant 0 : index
      %55 = vector.load %arg7[%c0_25, %c0_26] : memref<1x1xf32, #tpu.memory_space<vmem>>, vector<1x1xf32>
      tpu.vector_store %arg7[%c0_25, %c0_26], %54 {strides = array<i32>} : memref<1x1xf32, #tpu.memory_space<vmem>>, vector<1x1xf32>,
      %cst_27 = arith.constant 0.000000e+00 : f32
      %56 = vector.broadcast %cst_27 : f32 to vector<1x1xf32>
      %c0_28 = arith.constant 0 : index
      %c0_29 = arith.constant 0 : index
      %57 = vector.load %arg8[%c0_28, %c0_29] : memref<1x1xf32, #tpu.memory_space<vmem>>, vector<1x1xf32>
      tpu.vector_store %arg8[%c0_28, %c0_29], %56 {strides = array<i32>} : memref<1x1xf32, #tpu.memory_space<vmem>>, vector<1x1xf32>,
    } else {
    }
    %c0_i32_1 = arith.constant 0 : i32
    %3 = arith.addi %c0_i32_1, %arg1 : i32
    %c256_i32 = arith.constant 256 : i32
    %4 = arith.muli %3, %c256_i32 : i32
    %5 = tpu.iota {dimensions = array<i32: 1>} : vector<1x256xi32>
    %6 = vector.broadcast %4 : i32 to vector<1x256xi32>
    %7 = arith.addi %6, %5 : vector<1x256xi32>
    %c256_i32_2 = arith.constant 256 : i32
    %8 = vector.broadcast %c256_i32_2 : i32 to vector<1x256xi32>
    %9 = arith.cmpi slt, %7, %8 : vector<1x256xi32>
    %c0 = arith.constant 0 : index
    %c0_3 = arith.constant 0 : index
    %c0_4 = arith.constant 0 : index
    %10 = vector.load %arg2[%c0, %c0_3, %c0_4] : memref<1x4x256xf32, #tpu.memory_space<vmem>>, vector<1x4x256xf32>
    %11 = vector.shape_cast %10 : vector<1x4x256xf32> to vector<4x256xf32>
    %cst = arith.constant 0.000000e+00 : f32
    %12 = vector.shape_cast %9 : vector<1x256xi1> to vector<1x256xi1>
    %13 = vector.broadcast %12 : vector<1x256xi1> to vector<4x256xi1>
    %14 = vector.broadcast %cst : f32 to vector<4x256xf32>
    %15 = arith.select %13, %11, %14 : vector<4x256xi1>, vector<4x256xf32>
    %c0_5 = arith.constant 0 : index
    %c0_6 = arith.constant 0 : index
    %c0_7 = arith.constant 0 : index
    %16 = vector.load %arg3[%c0_5, %c0_6, %c0_7] : memref<1x1x256xi8, #tpu.memory_space<vmem>>, vector<1x1x256xi8>
    %17 = vector.shape_cast %16 : vector<1x1x256xi8> to vector<1x256xi8>
    %18 = arith.extsi %17 : vector<1x256xi8> to vector<1x256xi32>
    %c-1_i32 = arith.constant -1 : i32
    %19 = vector.broadcast %c-1_i32 : i32 to vector<1x256xi32>
    %20 = arith.select %9, %18, %19 : vector<1x256xi1>, vector<1x256xi32>
    %21 = tpu.iota {dimensions = array<i32: 0>} : vector<4x256xi32>
    %22 = vector.broadcast %20 : vector<1x256xi32> to vector<4x256xi32>
    %23 = arith.cmpi eq, %21, %22 : vector<4x256xi32>
    %cst_8 = arith.constant dense<0xFF800000> : vector<256xf32>
    %24 = vector.multi_reduction <maximumf>, %15, %cst_8 [0] : vector<4x256xf32> to vector<256xf32>
    %25 = vector.shape_cast %24 : vector<256xf32> to vector<1x256xf32>
    %26 = vector.broadcast %25 : vector<1x256xf32> to vector<4x256xf32>
    %27 = arith.subf %15, %26 : vector<4x256xf32>
    %28 = math.exp %27 : vector<4x256xf32>
    %cst_9 = arith.constant dense<0.000000e+00> : vector<256xf32>
    %29 = vector.multi_reduction <add>, %28, %cst_9 [0] : vector<4x256xf32> to vector<256xf32>
    %30 = vector.shape_cast %29 : vector<256xf32> to vector<1x256xf32>
    %31 = math.log %30 : vector<1x256xf32>
    %32 = arith.addf %25, %31 : vector<1x256xf32>
    %cst_10 = arith.constant 0.000000e+00 : f32
    %33 = vector.broadcast %cst_10 : f32 to vector<4x256xf32>
    %34 = arith.select %23, %15, %33 : vector<4x256xi1>, vector<4x256xf32>
    %cst_11 = arith.constant dense<0.000000e+00> : vector<256xf32>
    %35 = vector.multi_reduction <add>, %34, %cst_11 [0] : vector<4x256xf32> to vector<256xf32>
    %36 = vector.shape_cast %35 : vector<256xf32> to vector<1x256xf32>
    %37 = arith.extui %9 : vector<1x256xi1> to vector<1x256xi32>
    %38 = arith.sitofp %37 : vector<1x256xi32> to vector<1x256xf32>
    %c0_12 = arith.constant 0 : index
    %c0_13 = arith.constant 0 : index
    %39 = vector.load %arg7[%c0_12, %c0_13] : memref<1x1xf32, #tpu.memory_space<vmem>>, vector<1x1xf32>
    %40 = arith.subf %32, %36 : vector<1x256xf32>
    %41 = arith.mulf %38, %40 : vector<1x256xf32>
    %cst_14 = arith.constant dense<0.000000e+00> : vector<1xf32>
    %42 = vector.multi_reduction <add>, %41, %cst_14 [1] : vector<1x256xf32> to vector<1xf32>
    %43 = vector.shape_cast %42 : vector<1xf32> to vector<1x1xf32>
    %44 = arith.addf %39, %43 : vector<1x1xf32>
    %c0_15 = arith.constant 0 : index
    %c0_16 = arith.constant 0 : index
    %45 = vector.load %arg7[%c0_15, %c0_16] : memref<1x1xf32, #tpu.memory_space<vmem>>, vector<1x1xf32>
    tpu.vector_store %arg7[%c0_15, %c0_16], %44 {strides = array<i32>} : memref<1x1xf32, #tpu.memory_space<vmem>>, vector<1x1xf32>,
    %c0_17 = arith.constant 0 : index
    %c0_18 = arith.constant 0 : index
    %46 = vector.load %arg8[%c0_17, %c0_18] : memref<1x1xf32, #tpu.memory_space<vmem>>, vector<1x1xf32>
    %cst_19 = arith.constant dense<0.000000e+00> : vector<1xf32>
    %47 = vector.multi_reduction <add>, %38, %cst_19 [1] : vector<1x256xf32> to vector<1xf32>
    %48 = vector.shape_cast %47 : vector<1xf32> to vector<1x1xf32>
    %49 = arith.addf %46, %48 : vector<1x1xf32>
    %c0_20 = arith.constant 0 : index
    %c0_21 = arith.constant 0 : index
    %50 = vector.load %arg8[%c0_20, %c0_21] : memref<1x1xf32, #tpu.memory_space<vmem>>, vector<1x1xf32>
    tpu.vector_store %arg8[%c0_20, %c0_21], %49 {strides = array<i32>} : memref<1x1xf32, #tpu.memory_space<vmem>>, vector<1x1xf32>,
    %c0_i32_22 = arith.constant 0 : i32
    %51 = arith.cmpi eq, %arg1, %c0_i32_22 : i32
    %52 = arith.extui %51 : i1 to i32
    %c0_i32_23 = arith.constant 0 : i32
    %53 = arith.cmpi ne, %52, %c0_i32_23 : i32
    scf.if %53 {
      %c0_24 = arith.constant 0 : index
      %c0_25 = arith.constant 0 : index
      %54 = vector.load %arg7[%c0_24, %c0_25] : memref<1x1xf32, #tpu.memory_space<vmem>>, vector<1x1xf32>
      %c0_26 = arith.constant 0 : index
      %c0_27 = arith.constant 0 : index
      %c0_28 = arith.constant 0 : index
      %55 = vector.load %arg5[%c0_26, %c0_27, %c0_28] : memref<1x1x1xf32, #tpu.memory_space<vmem>>, vector<1x1x1xf32>
      %56 = vector.shape_cast %55 : vector<1x1x1xf32> to vector<1x1xf32>
      %57 = vector.shape_cast %54 : vector<1x1xf32> to vector<1x1x1xf32>
      tpu.vector_store %arg5[%c0_26, %c0_27, %c0_28], %57 {strides = array<i32>} : memref<1x1x1xf32, #tpu.memory_space<vmem>>, vector<1x1x1xf32>,
      %c0_29 = arith.constant 0 : index
      %c0_30 = arith.constant 0 : index
      %58 = vector.load %arg8[%c0_29, %c0_30] : memref<1x1xf32, #tpu.memory_space<vmem>>, vector<1x1xf32>
      %c0_31 = arith.constant 0 : index
      %c0_32 = arith.constant 0 : index
      %c0_33 = arith.constant 0 : index
      %59 = vector.load %arg6[%c0_31, %c0_32, %c0_33] : memref<1x1x1xf32, #tpu.memory_space<vmem>>, vector<1x1x1xf32>
      %60 = vector.shape_cast %59 : vector<1x1x1xf32> to vector<1x1xf32>
      %61 = vector.shape_cast %58 : vector<1x1xf32> to vector<1x1x1xf32>
      tpu.vector_store %arg6[%c0_31, %c0_32, %c0_33], %61 {strides = array<i32>} : memref<1x1x1xf32, #tpu.memory_space<vmem>>, vector<1x1x1xf32>,
    } else {
    }
    return
  }
  func.func @transform_0(%arg0: i32, %arg1: i32) -> (i32, i32, i32) {
    %c0_i32 = arith.constant 0 : i32
    %c0_i32_0 = arith.constant 0 : i32
    return %arg0, %c0_i32, %arg1 : i32, i32, i32
  }
  func.func @transform_1(%arg0: i32, %arg1: i32) -> (i32, i32, i32) {
    %c0_i32 = arith.constant 0 : i32
    %c0_i32_0 = arith.constant 0 : i32
    return %arg0, %c0_i32, %arg1 : i32, i32, i32
  }
  func.func @transform_2(%arg0: i32, %arg1: i32) -> (i32, i32) {
    %c0_i32 = arith.constant 0 : i32
    %c0_i32_0 = arith.constant 0 : i32
    %c0_i32_1 = arith.constant 0 : i32
    return %c0_i32, %c0_i32_0 : i32, i32
  }
  func.func @transform_3(%arg0: i32, %arg1: i32) -> (i32, i32, i32) {
    %c0_i32 = arith.constant 0 : i32
    %c0_i32_0 = arith.constant 0 : i32
    %c0_i32_1 = arith.constant 0 : i32
    return %arg0, %c0_i32, %c0_i32_0 : i32, i32, i32
  }
  func.func @transform_4(%arg0: i32, %arg1: i32) -> (i32, i32, i32) {
    %c0_i32 = arith.constant 0 : i32
    %c0_i32_0 = arith.constant 0 : i32
    %c0_i32_1 = arith.constant 0 : i32
    return %arg0, %c0_i32, %c0_i32_0 : i32, i32, i32
  }
}

</mosaic_0001>

<llo_original>
// kernel: _ce_impl.1
$region0: #{_ce_impl.1}
  #allocation0 [shape = 'u32[]', space=smem, size = 0x4, offset = 0x4, fixed_abs, tag = 'smem constant byte address 0x4 - core index']
  #allocation1 [shape = 'u32[72,128]{1,0:T(1,128)}', space=vmem, size = 0x9000, scoped, tag = 'internal scratch']
  #allocation2 [shape = 'f32[1,1]{1,0:T(1,128)}', space=vmem, size = 0x200, scoped, tag = 'scratch operand']
  #allocation3 [shape = 'f32[1,1]{1,0:T(1,128)}', space=vmem, size = 0x200, scoped, tag = 'scratch operand']
  %s0 = inlined_call_operand.vmem [shape: f32[2,4,256], index: 0, kind: input, shape index: {}]
  %s1 = inlined_call_operand.vmem [shape: s8[2,1,256], index: 1, kind: input, shape index: {}]
  %s2 = inlined_call_operand.vmem [shape: f32[4,1], index: 2, kind: input, shape index: {}]
  %s3 = inlined_call_operand.vmem [shape: f32[2,1,1], index: 3, kind: output, shape index: {0}]
  %s4 = inlined_call_operand.vmem [shape: f32[2,1,1], index: 4, kind: output, shape index: {1}]
  %5 = xla_tuple %s3, %s4
  %s6 = sld [smem:[#allocation0]]
  $region61: #{_ce_impl.1} parent=0
    _
  %s8 = ssub.s32 1, %s6
  %s9 = scalar_select 0, %s8, %s6
  loop: start=0, step=1, limit=4
  $region2: #{_ce_impl.1} parent=0 // loop_pre_header
    _
  $region3: #{_ce_impl.1} parent=0 // loop_header
    %s11 = sphi 0, %s15
    %p12 = scmp.ge.s32.totalorder %s11, 4
    %s18 = sphi 0, %s30
    %s19 = sphi 0, %s26
    %s20 = sphi 0, %s18
    %s21 = sphi 0, %s19
    %s22 = sphi 0, %s20
    %s23 = sphi 0, %s21
    %s35 = sphi 0, %s37
    %s38 = sphi 0, %s35
    %s39 = sphi 0, %s38
    %s55 = sphi 0, %s39
    %s63 = sphi 0, %s65
    %s66 = sphi 0, %s63
    %s67 = sphi 0, %s66
    %s83 = sphi 0, %s67
    %s87 = sphi 0, %s87
    %s89 = sphi 0, %s87
    %s90 = sphi 0, %s89
    %s104 = sphi 0, %s90
    %s110 = sphi 0, %s112
    %s113 = sphi 0, %s110
    %s114 = sphi 0, %s113
    %s130 = sphi 0, %s114
    %s136 = sphi 0, %s138
    %s139 = sphi 0, %s136
    %s140 = sphi 0, %s139
    %s156 = sphi 0, %s140
  $region4: #{_ce_impl.1} parent=0 // loop_header_branch
    %14 = sbr.rel (%p12) target = $region8
  $region5: #{_ce_impl.1} parent=0 // loop_body
    %s16 = ssub.s32 %s11, 1
    %s17 = ssub.s32 %s11, 2
    %s24 = sadd.s32 1, %s19
    %p25 = scmp.ge.s32.totalorder %s24, 1
    %s26 = scalar_select %p25, 0, %s24
    %s27 = sadd.s32 1, %s18
    %s28 = scalar_select %p25, %s27, %s18
    %p29 = scmp.ge.s32.totalorder %s28, 2
    %s30 = scalar_select %p29, 0, %s28
    %s31 = ssub.s32 %s18, %s30
    %s32 = ssub.s32 %s19, %s26
    %s33 = sor.u32 %s31, %s32
    %p34 = scmp.eq.s32.totalorder %s33, 0
    %s36 = sadd.s32 %s35, 1
    %s37 = scalar_select %p34, %s35, %s36
    %p40 = pneg %p34
    %p41 = scmp.eq.s32.totalorder %s11, 1
    %p42 = por %p40, %p41
    %p43 = scmp.ne.s32.totalorder %s35, %s38
    %p44 = scmp.eq.s32.totalorder %s11, 0
    %p45 = por %p43, %p44
    %p46 = scmp.ne.s32.totalorder %s35, %s38
    %p47 = scmp.eq.s32.totalorder %s16, 1
    %p48 = por %p46, %p47
    %p49 = scmp.ne.s32.totalorder %s38, %s39
    %p50 = scmp.eq.s32.totalorder %s16, 0
    %p51 = por %p49, %p50
    %p52 = scmp.ne.s32.totalorder %s38, %s39
    %p53 = scmp.eq.s32.totalorder %s17, 1
    %p54 = por %p52, %p53
    %p56 = scmp.ne.s32.totalorder %s39, %s55
    %p57 = scmp.eq.s32.totalorder %s17, 0
    %p58 = por %p56, %p57
    %s59 = ssub.s32 %s18, %s30
    %s60 = ssub.s32 %s19, %s26
    %s61 = sor.u32 %s59, %s60
    %p62 = scmp.eq.s32.totalorder %s61, 0
    %s64 = sadd.s32 %s63, 1
    %s65 = scalar_select %p62, %s63, %s64
    %p68 = pneg %p62
    %p69 = scmp.eq.s32.totalorder %s11, 1
    %p70 = por %p68, %p69
    %p71 = scmp.ne.s32.totalorder %s63, %s66
    %p72 = scmp.eq.s32.totalorder %s11, 0
    %p73 = por %p71, %p72
    %p74 = scmp.ne.s32.totalorder %s63, %s66
    %p75 = scmp.eq.s32.totalorder %s16, 1
    %p76 = por %p74, %p75
    %p77 = scmp.ne.s32.totalorder %s66, %s67
    %p78 = scmp.eq.s32.totalorder %s16, 0
    %p79 = por %p77, %p78
    %p80 = scmp.ne.s32.totalorder %s66, %s67
    %p81 = scmp.eq.s32.totalorder %s17, 1
    %p82 = por %p80, %p81
    %p84 = scmp.ne.s32.totalorder %s67, %s83
    %p85 = scmp.eq.s32.totalorder %s17, 0
    %p86 = por %p84, %p85
    %s88 = sadd.s32 %s87, 1
    %p91 = scmp.eq.s32.totalorder %s11, 1
    %p92 = scmp.ne.s32.totalorder %s87, %s89
    %p93 = scmp.eq.s32.totalorder %s11, 0
    %p94 = por %p92, %p93
    %p95 = scmp.ne.s32.totalorder %s87, %s89
    %p96 = scmp.eq.s32.totalorder %s16, 1
    %p97 = por %p95, %p96
    %p98 = scmp.ne.s32.totalorder %s89, %s90
    %p99 = scmp.eq.s32.totalorder %s16, 0
    %p100 = por %p98, %p99
    %p101 = scmp.ne.s32.totalorder %s89, %s90
    %p102 = scmp.eq.s32.totalorder %s17, 1
    %p103 = por %p101, %p102
    %p105 = scmp.ne.s32.totalorder %s90, %s104
    %p106 = scmp.eq.s32.totalorder %s17, 0
    %p107 = por %p105, %p106
    %s108 = ssub.s32 %s18, %s30
    %p109 = scmp.eq.s32.totalorder %s108, 0
    %s111 = sadd.s32 %s110, 1
    %s112 = scalar_select %p109, %s110, %s111
    %p115 = pneg %p109
    %p116 = scmp.eq.s32.totalorder %s11, 1
    %p117 = por %p115, %p116
    %p118 = scmp.ne.s32.totalorder %s110, %s113
    %p119 = scmp.eq.s32.totalorder %s11, 0
    %p120 = por %p118, %p119
    %p121 = scmp.ne.s32.totalorder %s110, %s113
    %p122 = scmp.eq.s32.totalorder %s16, 1
    %p123 = por %p121, %p122
    %p124 = scmp.ne.s32.totalorder %s113, %s114
    %p125 = scmp.eq.s32.totalorder %s16, 0
    %p126 = por %p124, %p125
    %p127 = scmp.ne.s32.totalorder %s113, %s114
    %p128 = scmp.eq.s32.totalorder %s17, 1
    %p129 = por %p127, %p128
    %p131 = scmp.ne.s32.totalorder %s114, %s130
    %p132 = scmp.eq.s32.totalorder %s17, 0
    %p133 = por %p131, %p132
    %s134 = ssub.s32 %s18, %s30
    %p135 = scmp.eq.s32.totalorder %s134, 0
    %s137 = sadd.s32 %s136, 1
    %s138 = scalar_select %p135, %s136, %s137
    %p141 = pneg %p135
    %p142 = scmp.eq.s32.totalorder %s11, 1
    %p143 = por %p141, %p142
    %p144 = scmp.ne.s32.totalorder %s136, %s139
    %p145 = scmp.eq.s32.totalorder %s11, 0
    %p146 = por %p144, %p145
    %p147 = scmp.ne.s32.totalorder %s136, %s139
    %p148 = scmp.eq.s32.totalorder %s16, 1
    %p149 = por %p147, %p148
    %p150 = scmp.ne.s32.totalorder %s139, %s140
    %p151 = scmp.eq.s32.totalorder %s16, 0
    %p152 = por %p150, %p151
    %p153 = scmp.ne.s32.totalorder %s139, %s140
    %p154 = scmp.eq.s32.totalorder %s17, 1
    %p155 = por %p153, %p154
    %p157 = scmp.ne.s32.totalorder %s140, %s156
    %p158 = scmp.eq.s32.totalorder %s17, 0
    %p159 = por %p157, %p158
    %p160 = scmp.le.s32.totalorder 1, %s11
    %p161 = scmp.lt.s32.totalorder %s11, 3
    %p162 = pnand %p160, %p161
    %p163 = pneg %p162
    // Predicated region
    $region9: #{_ce_impl.1} parent=5 // pred_check
      _
    $region10: #{_ce_impl.1} parent=5 // pred_check_branch
      %165 = sbr.rel (%p162) target = $region12
    $region11: #{_ce_impl.1} parent=5 // pred_region
      %s166 = ssub.s32 %s11, 1
      // Predicated region
      $region13: #{_ce_impl.1} parent=11 // pred_check
        %p167 = pneg %p100
      $region14: #{_ce_impl.1} parent=11 // pred_check_branch
        %169 = sbr.rel (%p167) target = $region16
      $region15: #{_ce_impl.1} parent=11 // pred_region
        _
      $region16: #{_ce_impl.1} parent=11 // pred_fallthru
        _
    $region12: #{_ce_impl.1} parent=5 // pred_fallthru
      _
    %p170 = scmp.lt.s32.totalorder %s11, 2
    // Predicated region
    $region17: #{_ce_impl.1} parent=5 // pred_check
      %p171 = pneg %p170
    $region18: #{_ce_impl.1} parent=5 // pred_check_branch
      %173 = sbr.rel (%p171) target = $region20
    $region19: #{_ce_impl.1} parent=5 // pred_region
      // Predicated region
      $region21: #{_ce_impl.1} parent=19 // pred_check
        %p174 = pneg %p45
      $region22: #{_ce_impl.1} parent=19 // pred_check_branch
        %176 = sbr.rel (%p174) target = $region24
      $region23: #{_ce_impl.1} parent=19 // pred_region
        %s177 = smul.u32 2, %s19
        %p178 = scmp.lt.s32.totalorder %s18, 1
        %s179 = scalar_select %p178, %s18, 1
        %p180 = scmp.lt.s32.totalorder %s177, 1
        %s181 = scalar_select %p180, %s177, 1
        %s182 = smul.addr %s179, 2
        %s183 = sadd.s32 %s181, %s182
        %s184 = smul.addr %s183, 4
        %s185 = scalar_lea.vmem %s0, %s184
        %s186 = smul.u32 2, %s19
      $region24: #{_ce_impl.1} parent=19 // pred_fallthru
        _
      // Predicated region
      $region25: #{_ce_impl.1} parent=19 // pred_check
        %p187 = pneg %p73
      $region26: #{_ce_impl.1} parent=19 // pred_check_branch
        %189 = sbr.rel (%p187) target = $region28
      $region27: #{_ce_impl.1} parent=19 // pred_region
        %s190 = smul.u32 2, %s19
        %p191 = scmp.lt.s32.totalorder %s18, 1
        %s192 = scalar_select %p191, %s18, 1
        %p193 = scmp.lt.s32.totalorder %s190, 1
        %s194 = scalar_select %p193, %s190, 1
        %s195 = smul.addr %s192, 2
        %s196 = sadd.s32 %s194, %s195
        %s197 = scalar_lea.vmem %s1, %s196
        %s198 = smul.u32 2, %s19
      $region28: #{_ce_impl.1} parent=19 // pred_fallthru
        _
    $region20: #{_ce_impl.1} parent=5 // pred_fallthru
      _
    %p199 = scmp.le.s32.totalorder 1, %s11
    %p200 = scmp.lt.s32.totalorder %s11, 3
    %p201 = pnand %p199, %p200
    %p202 = pneg %p201
    // Predicated region
    $region29: #{_ce_impl.1} parent=5 // pred_check
      _
    $region30: #{_ce_impl.1} parent=5 // pred_check_branch
      %204 = sbr.rel (%p201) target = $region32
    $region31: #{_ce_impl.1} parent=5 // pred_region
      %s205 = ssub.s32 %s11, 1
      %s206 = smul.u32 2, %s21
      %p207 = scmp.lt.s32.totalorder %s20, 1
      %s208 = scalar_select %p207, %s20, 1
      %p209 = scmp.lt.s32.totalorder %s206, 1
      %s210 = scalar_select %p209, %s206, 1
      %s211 = smul.addr %s208, 2
      %s212 = sadd.s32 %s210, %s211
      %s213 = smul.addr %s212, 4
      %s214 = scalar_lea.vmem %s0, %s213
      %p215 = pneg %p51
      %p216 = pneg %p48
      %s217 = smul.u32 2, %s21
      %p218 = scmp.lt.s32.totalorder %s20, 1
      %s219 = scalar_select %p218, %s20, 1
      %p220 = scmp.lt.s32.totalorder %s217, 1
      %s221 = scalar_select %p220, %s217, 1
      %s222 = smul.addr %s219, 2
      %s223 = sadd.s32 %s221, %s222
      %s224 = scalar_lea.vmem %s1, %s223
      %p225 = pneg %p79
      %p226 = pneg %p76
      %p227 = pneg %p100
      %p228 = pneg %p97
      %p229 = pneg %p126
      %p230 = pneg %p123
      %p231 = scmp.lt.s32.totalorder %s20, 1
      %s232 = scalar_select %p231, %s20, 1
      %s233 = scalar_lea.vmem %s3, %s232
      %p234 = pneg %p152
      %p235 = pneg %p149
      %p236 = scmp.lt.s32.totalorder %s20, 1
      %s237 = scalar_select %p236, %s20, 1
      %s238 = scalar_lea.vmem %s4, %s237
      %s239 = smul.u32 2, %s21
      %p240 = scmp.lt.s32.totalorder %s20, 1
      %s241 = scalar_select %p240, %s20, 1
      %p242 = scmp.lt.s32.totalorder %s239, 1
      %s243 = scalar_select %p242, %s239, 1
      %s244 = smul.addr %s241, 2
      %s245 = sadd.s32 %s243, %s244
      %s246 = smul.addr %s245, 4
      %s247 = scalar_lea.vmem %s0, %s246
      %s248 = smul.u32 2, %s21
      %s249 = smul.u32 2, %s21
      %p250 = scmp.lt.s32.totalorder %s20, 1
      %s251 = scalar_select %p250, %s20, 1
      %p252 = scmp.lt.s32.totalorder %s249, 1
      %s253 = scalar_select %p252, %s249, 1
      %s254 = smul.addr %s251, 2
      %s255 = sadd.s32 %s253, %s254
      %s256 = scalar_lea.vmem %s1, %s255
      %s257 = smul.u32 2, %s21
      %p258 = scmp.lt.s32.totalorder %s20, 1
      %s259 = scalar_select %p258, %s20, 1
      %s260 = scalar_lea.vmem %s3, %s259
      %p261 = scmp.lt.s32.totalorder %s20, 1
      %s262 = scalar_select %p261, %s20, 1
      %s263 = scalar_lea.vmem %s4, %s262
      %p264 = scmp.eq.s32.totalorder %s21, 0
      // Predicated region
      $region33: #{_ce_impl.1} parent=31 // pred_check
        %p265 = pneg %p264
      $region34: #{_ce_impl.1} parent=31 // pred_check_branch
        %267 = sbr.rel (%p265) target = $region36
      $region35: #{_ce_impl.1} parent=31 // pred_region
        %vm268 = vcmask 0
        %269 = vst.msk [vmem:[#allocation2] sm:$0x1] %vm268, 0.0
        %270 = vst.msk [vmem:[#allocation3] sm:$0x1] %vm268, 0.0
      $region36: #{_ce_impl.1} parent=31 // pred_fallthru
        _
      %s271 = smul.u32 %s21, 256
      %v272 = vlaneseq
      %v273 = vand.u32 %v272, 127
      %v274 = vadd.s32 %v273, 128
      %v275 = vstv %s271
      %v276 = vadd.s32 %v275, %v273
      %v277 = vadd.s32 %v275, %v274
      %vm278 = vcmp.lt.s32.totalorder %v276, 256
      %vm279 = vcmp.lt.s32.totalorder %v277, 256
      %v280 = vld [vmem:[%s247] sm:$0xff]
      %v281 = vsel %vm278, 1, 0
      %v282 = vsel %vm279, 1, 0
      %vm283 = vcmp.eq.s32.totalorder %v281, 1
      %vm284 = vcmp.eq.s32.totalorder %v282, 1
      %286 = vst [vmem:[#allocation1] ss:$2 sm:$0xff] %v280
      %v287 = vld.sshfl [vmem:[#allocation1] sm:$0xff pattern:$0x75316420]
      %v288 = vld.sshfl [vmem:[#allocation1 + $0x8] sm:$0xff pattern:$0x75316420]
      %v291 = vsel %vm283, %v287, 0.0
      %v292 = vsel %vm284, %v288, 0.0
      %v293 = vld [vmem:[%s256] sm:$0x3]
      %v294 = vunpack.c.0.s8 %v293
      %v295 = vperm.slane %v294, 0
      %v296 = vperm.slane %v294, 4
      %v297 = vsel %vm278, %v295, 4294967295
      %v298 = vsel %vm279, %v296, 4294967295
      %v299 = vlaneseq
      %v300 = vshrl.u32 %v299, 7
      %v301 = vperm.slane %v297, 0
      %v302 = vperm.slane %v298, 0
      %vm303 = vcmp.eq.s32.totalorder %v300, %v301
      %vm304 = vcmp.eq.s32.totalorder %v300, %v302
      %vm305 = vcmask 1043456
      %v306 = vsel %vm305, %v291, -inf
      %v307 = vrot.slane %v306, 4
      %v308 = vmax.f32 %v306, %v307
      %v309 = vrot.slane %v308, 2
      %v310 = vmax.f32 %v308, %v309
      %v311 = vrot.slane %v310, 1
      %v312 = vmax.f32 %v310, %v311
      %v313 = vsel %vm305, %v292, -inf
      %v314 = vrot.slane %v313, 4
      %v315 = vmax.f32 %v313, %v314
      %v316 = vrot.slane %v315, 2
      %v317 = vmax.f32 %v315, %v316
      %v318 = vrot.slane %v317, 1
      %v319 = vmax.f32 %v317, %v318
      %v320 = vsub.f32 %v291, %v312
      %v321 = vsub.f32 %v292, %v319
      %v322 = vmul.f32 %v320, 1.442695
      %v323 = vpow.pop %v322
      %v324 = vmul.f32 %v321, 1.442695
      %v325 = vpow.pop %v324
      %v326 = vsel %vm305, %v323, 0.0
      %v327 = vrot.slane %v326, 4
      %v328 = vadd.f32 %v326, %v327
      %v329 = vrot.slane %v328, 2
      %v330 = vadd.f32 %v328, %v329
      %v331 = vrot.slane %v330, 1
      %v332 = vadd.f32 %v330, %v331
      %v333 = vsel %vm305, %v325, 0.0
      %v334 = vrot.slane %v333, 4
      %v335 = vadd.f32 %v333, %v334
      %v336 = vrot.slane %v335, 2
      %v337 = vadd.f32 %v335, %v336
      %v338 = vrot.slane %v337, 1
      %v339 = vadd.f32 %v337, %v338
      %v340 = vlog2.pop %v332
      %v341 = vmul.f32 %v340, 0.6931472
      %v342 = vlog2.pop %v339
      %v343 = vmul.f32 %v342, 0.6931472
      %v344 = vadd.f32 %v312, %v341
      %v345 = vadd.f32 %v319, %v343
      %v346 = vsel %vm303, %v291, 0.0
      %v347 = vsel %vm304, %v292, 0.0
      %v348 = vsel %vm305, %v346, 0.0
      %v349 = vrot.slane %v348, 4
      %v350 = vadd.f32 %v348, %v349
      %v351 = vrot.slane %v350, 2
      %v352 = vadd.f32 %v350, %v351
      %v353 = vrot.slane %v352, 1
      %v354 = vadd.f32 %v352, %v353
      %v355 = vsel %vm305, %v347, 0.0
      %v356 = vrot.slane %v355, 4
      %v357 = vadd.f32 %v355, %v356
      %v358 = vrot.slane %v357, 2
      %v359 = vadd.f32 %v357, %v358
      %v360 = vrot.slane %v359, 1
      %v361 = vadd.f32 %v359, %v360
      %v362 = vcvt.s32.f32 %v281
      %v363 = vcvt.s32.f32 %v282
      %v364 = vld [vmem:[#allocation2] sm:$0x1]
      %v365 = vsub.f32 %v344, %v354
      %v366 = vsub.f32 %v345, %v361
      %v367 = vmul.f32 %v362, %v365
      %v368 = vmul.f32 %v363, %v366
      %v369 = vadd.f32 %v367, %v368
      %370 = vadd.xlane.f32.xlu0 %v369
      %v371 = vpop.xlane.xlu0 %370
      %v372 = vadd.f32 %v364, %v371
      %vm373 = vcmask 0
      %374 = vst.msk [vmem:[#allocation2] sm:$0x1] %vm373, %v372
      %v375 = vld [vmem:[#allocation3] sm:$0x1]
      %v376 = vadd.f32 %v362, %v363
      %377 = vadd.xlane.f32.xlu0 %v376
      %v378 = vpop.xlane.xlu0 %377
      %v379 = vadd.f32 %v375, %v378
      %380 = vst.msk [vmem:[#allocation3] sm:$0x1] %vm373, %v379
      // Predicated region
      $region37: #{_ce_impl.1} parent=31 // pred_check
        %p381 = pneg %p264
      $region38: #{_ce_impl.1} parent=31 // pred_check_branch
        %383 = sbr.rel (%p381) target = $region40
      $region39: #{_ce_impl.1} parent=31 // pred_region
        %v384 = vld [vmem:[#allocation2] sm:$0x1]
        %385 = vst.msk [vmem:[%s260] sm:$0x1] %vm373, %v384
        %v386 = vld [vmem:[#allocation3] sm:$0x1]
        %387 = vst.msk [vmem:[%s263] sm:$0x1] %vm373, %v386
      $region40: #{_ce_impl.1} parent=31 // pred_fallthru
        _
      %p388 = scmp.lt.s32.totalorder %s20, 1
      %s389 = scalar_select %p388, %s20, 1
      %s390 = scalar_lea.vmem %s3, %s389
      %p391 = scmp.lt.s32.totalorder %s20, 1
      %s392 = scalar_select %p391, %s20, 1
      %s393 = scalar_lea.vmem %s4, %s392
      // Predicated region
      $region41: #{_ce_impl.1} parent=31 // pred_check
        %p394 = pneg %p123
      $region42: #{_ce_impl.1} parent=31 // pred_check_branch
        %396 = sbr.rel (%p394) target = $region44
      $region43: #{_ce_impl.1} parent=31 // pred_region
        _
      $region44: #{_ce_impl.1} parent=31 // pred_fallthru
        _
      // Predicated region
      $region45: #{_ce_impl.1} parent=31 // pred_check
        %p397 = pneg %p149
      $region46: #{_ce_impl.1} parent=31 // pred_check_branch
        %399 = sbr.rel (%p397) target = $region48
      $region47: #{_ce_impl.1} parent=31 // pred_region
        _
      $region48: #{_ce_impl.1} parent=31 // pred_fallthru
        _
    $region32: #{_ce_impl.1} parent=5 // pred_fallthru
      _
    %p400 = scmp.le.s32.totalorder 2, %s11
    // Predicated region
    $region49: #{_ce_impl.1} parent=5 // pred_check
      %p401 = pneg %p400
    $region50: #{_ce_impl.1} parent=5 // pred_check_branch
      %403 = sbr.rel (%p401) target = $region52
    $region51: #{_ce_impl.1} parent=5 // pred_region
      %s404 = ssub.s32 %s11, 2
      // Predicated region
      $region53: #{_ce_impl.1} parent=51 // pred_check
        %p405 = pneg %p129
      $region54: #{_ce_impl.1} parent=51 // pred_check_branch
        %407 = sbr.rel (%p405) target = $region56
      $region55: #{_ce_impl.1} parent=51 // pred_region
        %p408 = scmp.lt.s32.totalorder %s22, 1
        %s409 = scalar_select %p408, %s22, 1
        %s410 = scalar_lea.vmem %s3, %s409
      $region56: #{_ce_impl.1} parent=51 // pred_fallthru
        _
      // Predicated region
      $region57: #{_ce_impl.1} parent=51 // pred_check
        %p411 = pneg %p155
      $region58: #{_ce_impl.1} parent=51 // pred_check_branch
        %413 = sbr.rel (%p411) target = $region60
      $region59: #{_ce_impl.1} parent=51 // pred_region
        %p414 = scmp.lt.s32.totalorder %s22, 1
        %s415 = scalar_select %p414, %s22, 1
        %s416 = scalar_lea.vmem %s4, %s415
      $region60: #{_ce_impl.1} parent=51 // pred_fallthru
        _
    $region52: #{_ce_impl.1} parent=5 // pred_fallthru
      _
  $region6: #{_ce_impl.1} parent=0 // loop_footer
    %s15 = sadd.s32 1, %s11
  $region7: #{_ce_impl.1} parent=0 // loop_footer_branch
    %10 = sbr.rel target = $region3
  $region8: #{_ce_impl.1} parent=0 // loop_exit
    _

</llo_original>
